<compile_context>
chip_gen: v6e
topology: v6e:2x2x1
jax: 0.10.0
libtpu: 0.0.40
codegen_flags: <defaults>
</compile_context>

<pallas_src>
import jax
import jax.numpy as jnp
from jax import lax
from jax.experimental import pallas as pl
from jax.experimental.pallas import tpu as pltpu


# ---------------------------------------------------------------------------
# Kernel
# ---------------------------------------------------------------------------
def _make_zoom_kernel(C, H, W, CW, TH, top, left, fill, ofs, two_blocks):
    """Build the per-row-tile kernel. All geometry is static (Python ints)."""
    LEFT = left
    RIGHT = CW - left - W
    KEEP = TH - ofs  # rows taken from the first source block

    def kernel(*refs):
        if two_blocks:
            a_ref, b_ref, o_ref, mid_ref = refs
        else:
            a_ref, o_ref = refs
            mid_ref = a_ref  # already row-aligned when ofs == 0
        gy = pl.program_id(0)
        dt = o_ref.dtype

        # canvas-row index of every element of the (TH, W) middle slab
        row = gy * TH + lax.broadcasted_iota(jnp.int32, (TH, W), 0)
        row_ok = (row >= top) & (row < top + H)

        if two_blocks:
            # re-align the two consecutive TH-row source blocks so that
            # scratch row r holds source row (gy*TH - top + r)
            mid_ref[:, :KEEP, :] = a_ref[:, ofs:, :]
            mid_ref[:, KEEP:, :] = b_ref[:, :ofs, :]

        for c in range(C):
            fc = float(fill[c])
            # middle columns: pasted image rows, fill elsewhere
            o_ref[c, :, LEFT:LEFT + W] = jnp.where(row_ok, mid_ref[c], fc).astype(dt)
            # left / right fill bands (static widths)
            if LEFT > 0:
                o_ref[c, :, :LEFT] = jnp.full((TH, LEFT), fc, dt)
            if RIGHT > 0:
                o_ref[c, :, LEFT + W:] = jnp.full((TH, RIGHT), fc, dt)

    return kernel


def _pick_tile_rows(C, CW, itemsize, canvas_h, target_bytes=1 << 20):
    rows = target_bytes // max(1, C * CW * itemsize)
    rows = max(8, (rows // 8) * 8)
    rows = min(rows, 512)
    rows = min(rows, ((canvas_h + 7) // 8) * 8)
    return max(8, rows)


def _zoom_out_canvas(image, canvas_h, canvas_w, top, left, fill, tile_rows=None):
    """Paste `image` (C,H,W) into a (C, canvas_h, canvas_w) canvas of `fill`."""
    C, H, W = image.shape
    dtype = image.dtype
    TH = tile_rows if tile_rows is not None else _pick_tile_rows(
        C, canvas_w, dtype.itemsize, canvas_h)
    assert TH % 8 == 0

    ofs = (-top) % TH              # constant intra-block source-row offset
    top_blk = -((-top) // TH)      # ceil(top / TH)
    n_in_blocks = max(1, -(-H // TH))
    two_blocks = ofs != 0

    def in_map(delta):
        def index_map(gy):
            b = gy - top_blk + delta
            return (0, jnp.clip(b, 0, n_in_blocks - 1), 0)
        return index_map

    in_specs = [pl.BlockSpec((C, TH, W), in_map(0))]
    operands = [image]
    scratch = []
    if two_blocks:
        in_specs.append(pl.BlockSpec((C, TH, W), in_map(1)))
        operands.append(image)
        scratch.append(pltpu.VMEM((C, TH, W), dtype))

    kernel = _make_zoom_kernel(C, H, W, canvas_w, TH, top, left, fill, ofs,
                               two_blocks)

    return pl.pallas_call(
        kernel,
        out_shape=jax.ShapeDtypeStruct((C, canvas_h, canvas_w), dtype),
        grid=(pl.cdiv(canvas_h, TH),),
        in_specs=in_specs,
        out_specs=pl.BlockSpec((C, TH, canvas_w), lambda gy: (0, gy, 0)),
        scratch_shapes=scratch,
        compiler_params=pltpu.CompilerParams(
            dimension_semantics=("parallel",)),
    )(*operands)


# ---------------------------------------------------------------------------
# Module-level wrapper (mirrors RandomZoomOut.forward)
# ---------------------------------------------------------------------------
def random_zoom_out(image, key, *, fill=None, side_range=(1.0, 4.0), p=0.5,
                    target=None, tile_rows=None, return_params=False):
    if side_range[0] < 1.0 or side_range[0] > side_range[1]:
        raise ValueError(f"Invalid canvas side range provided {side_range}.")
    if image.ndim not in (2, 3):
        raise ValueError(f"image should be 2/3 dimensional. Got {image.ndim} dimensions.")
    if image.ndim == 2:
        image = image[None]
    C, orig_h, orig_w = image.shape

    if fill is None:
        fill = [0.0] * C
    fill = list(fill)
    if len(fill) == 1:
        fill = fill * C
    assert len(fill) == C

    k_p, k_r, k_lt = jax.random.split(key, 3)
    # torch: `if torch.rand(1) < self.p: return image, target`
    if float(jax.random.uniform(k_p, ())) < p:
        return (image, target, None) if return_params else (image, target)

    r = side_range[0] + float(jax.random.uniform(k_r, ())) * (side_range[1] - side_range[0])
    canvas_w = int(orig_w * r)
    canvas_h = int(orig_h * r)
    r2 = jax.random.uniform(k_lt, (2,))
    left = int((canvas_w - orig_w) * float(r2[0]))
    top = int((canvas_h - orig_h) * float(r2[1]))

    out = _zoom_out_canvas(image, canvas_h, canvas_w, top, left, fill,
                           tile_rows=tile_rows)

    if target is not None:
        target = dict(target)
        boxes = target["boxes"]
        boxes = boxes.at[:, 0::2].add(float(left)).at[:, 1::2].add(float(top))
        target["boxes"] = boxes

    params = dict(canvas_h=canvas_h, canvas_w=canvas_w, top=top, left=left,
                  fill=fill)
    return (out, target, params) if return_params else (out, target)


# ---------------------------------------------------------------------------
# Pure-JAX reference for correctness checking
# ---------------------------------------------------------------------------
def _reference_zoom_out(image, canvas_h, canvas_w, top, left, fill):
    C, H, W = image.shape
    canvas = jnp.broadcast_to(
        jnp.asarray(fill, image.dtype).reshape(C, 1, 1), (C, canvas_h, canvas_w))
    return canvas.at[:, top:top + H, left:left + W].set(image)


if __name__ == "__main__":
    key = jax.random.PRNGKey(0)
    k_img, k_zoom = jax.random.split(key)
    image = jax.random.uniform(k_img, (3, 16, 16), dtype=jnp.float32)

    # 1) direct kernel checks vs reference: covers aligned (ofs==0) and
    #    unaligned (ofs!=0) source-row paths, partial tiles, zero/non-zero pads.
    cases = [
        dict(canvas_h=40, canvas_w=48, top=7, left=5, fill=[0.1, 0.2, 0.3]),
        dict(canvas_h=32, canvas_w=64, top=16, left=0, fill=[0.0, 0.0, 0.0]),
        dict(canvas_h=16, canvas_w=16, top=0, left=0, fill=[0.5, 0.5, 0.5]),
    ]
    for cfg in cases:
        out = _zoom_out_canvas(image, cfg["canvas_h"], cfg["canvas_w"],
                               cfg["top"], cfg["left"], cfg["fill"],
                               tile_rows=16)
        out = jax.block_until_ready(out)
        ref = _reference_zoom_out(image, cfg["canvas_h"], cfg["canvas_w"],
                                  cfg["top"], cfg["left"], cfg["fill"])
        assert out.shape == ref.shape and out.dtype == image.dtype
        assert bool(jnp.all(jnp.isfinite(out)))
        assert bool(jnp.array_equal(out, ref))

    # 2) end-to-end module semantics (p=0.0 -> zoom always applied) + box shift.
    target = {"boxes": jnp.array([[1.0, 2.0, 5.0, 6.0],
                                  [0.0, 0.0, 10.0, 12.0]], dtype=jnp.float32)}
    out, new_target, prm = random_zoom_out(
        image, k_zoom, fill=[0.2, 0.4, 0.6], p=0.0, target=target,
        return_params=True)
    out = jax.block_until_ready(out)
    ref = _reference_zoom_out(image, prm["canvas_h"], prm["canvas_w"],
                              prm["top"], prm["left"], prm["fill"])
    assert bool(jnp.array_equal(out, ref))
    exp_boxes = (target["boxes"].at[:, 0::2].add(float(prm["left"]))
                                .at[:, 1::2].add(float(prm["top"])))
    assert bool(jnp.allclose(new_target["boxes"], exp_boxes))

    # 3) p=1.0 -> identity branch (torch: rand(1) < p returns image unchanged).
    same, _ = random_zoom_out(image, k_zoom, p=1.0)
    assert same.shape == image.shape and bool(jnp.array_equal(same, image))

    print("KERNEL_OK")
</pallas_src>

<mosaic_0001>
module attributes {stable_mosaic.version = 11 : i64} {
  func.func @kernel(%arg0: i32, %arg1: memref<3x16x16xf32, #tpu.memory_space<vmem>>, %arg2: memref<3x16x16xf32, #tpu.memory_space<vmem>>, %arg3: memref<3x16x48xf32, #tpu.memory_space<vmem>>, %arg4: memref<3x16x16xf32, #tpu.memory_space<vmem>>) attributes {dimension_semantics = [#tpu.dimension_semantics<parallel>], iteration_bounds = array<i64: 3>, scalar_prefetch = 0 : i64, scratch_operands = 1 : i64, tpu.core_type = #tpu.core_type<tc>, window_params = [{transform_indices = @transform_0, window_bounds = array<i64: 3, 16, 16>}, {transform_indices = @transform_1, window_bounds = array<i64: 3, 16, 16>}, {transform_indices = @transform_2, window_bounds = array<i64: 3, 16, 48>}]} {
    %c16_i32 = arith.constant 16 : i32
    %0 = arith.muli %arg0, %c16_i32 : i32
    %1 = tpu.iota {dimensions = array<i32: 0>} : vector<16x16xi32>
    %2 = vector.broadcast %0 : i32 to vector<16x16xi32>
    %3 = arith.addi %2, %1 : vector<16x16xi32>
    %c7_i32 = arith.constant 7 : i32
    %4 = vector.broadcast %c7_i32 : i32 to vector<16x16xi32>
    %5 = arith.cmpi sge, %3, %4 : vector<16x16xi32>
    %c23_i32 = arith.constant 23 : i32
    %6 = vector.broadcast %c23_i32 : i32 to vector<16x16xi32>
    %7 = arith.cmpi slt, %3, %6 : vector<16x16xi32>
    %8 = arith.andi %5, %7 : vector<16x16xi1>
    %c0 = arith.constant 0 : index
    %c9 = arith.constant 9 : index
    %c0_0 = arith.constant 0 : index
    %9 = vector.load %arg1[%c0, %c9, %c0_0] : memref<3x16x16xf32, #tpu.memory_space<vmem>>, vector<3x7x16xf32>
    %c0_1 = arith.constant 0 : index
    %c0_2 = arith.constant 0 : index
    %c0_3 = arith.constant 0 : index
    %10 = vector.load %arg4[%c0_1, %c0_2, %c0_3] : memref<3x16x16xf32, #tpu.memory_space<vmem>>, vector<3x7x16xf32>
    tpu.vector_store %arg4[%c0_1, %c0_2, %c0_3], %9 {strides = array<i32>} : memref<3x16x16xf32, #tpu.memory_space<vmem>>, vector<3x7x16xf32>,
    %c0_4 = arith.constant 0 : index
    %c0_5 = arith.constant 0 : index
    %c0_6 = arith.constant 0 : index
    %11 = vector.load %arg2[%c0_4, %c0_5, %c0_6] : memref<3x16x16xf32, #tpu.memory_space<vmem>>, vector<3x9x16xf32>
    %c0_7 = arith.constant 0 : index
    %c7 = arith.constant 7 : index
    %c0_8 = arith.constant 0 : index
    %12 = vector.load %arg4[%c0_7, %c7, %c0_8] : memref<3x16x16xf32, #tpu.memory_space<vmem>>, vector<3x9x16xf32>
    tpu.vector_store %arg4[%c0_7, %c7, %c0_8], %11 {strides = array<i32>} : memref<3x16x16xf32, #tpu.memory_space<vmem>>, vector<3x9x16xf32>,
    %c0_9 = arith.constant 0 : index
    %c0_10 = arith.constant 0 : index
    %c0_11 = arith.constant 0 : index
    %13 = vector.load %arg4[%c0_9, %c0_10, %c0_11] : memref<3x16x16xf32, #tpu.memory_space<vmem>>, vector<1x16x16xf32>
    %14 = vector.shape_cast %13 : vector<1x16x16xf32> to vector<16x16xf32>
    %cst = arith.constant 1.000000e-01 : f32
    %15 = vector.broadcast %cst : f32 to vector<16x16xf32>
    %16 = arith.select %8, %14, %15 : vector<16x16xi1>, vector<16x16xf32>
    %c0_12 = arith.constant 0 : index
    %c0_13 = arith.constant 0 : index
    %c5 = arith.constant 5 : index
    %17 = vector.load %arg3[%c0_12, %c0_13, %c5] : memref<3x16x48xf32, #tpu.memory_space<vmem>>, vector<1x16x16xf32>
    %18 = vector.shape_cast %17 : vector<1x16x16xf32> to vector<16x16xf32>
    %19 = vector.shape_cast %16 : vector<16x16xf32> to vector<1x16x16xf32>
    tpu.vector_store %arg3[%c0_12, %c0_13, %c5], %19 {strides = array<i32>} : memref<3x16x48xf32, #tpu.memory_space<vmem>>, vector<1x16x16xf32>,
    %cst_14 = arith.constant 1.000000e-01 : f32
    %20 = vector.broadcast %cst_14 : f32 to vector<16x5xf32>
    %c0_15 = arith.constant 0 : index
    %c0_16 = arith.constant 0 : index
    %c0_17 = arith.constant 0 : index
    %21 = vector.load %arg3[%c0_15, %c0_16, %c0_17] : memref<3x16x48xf32, #tpu.memory_space<vmem>>, vector<1x16x5xf32>
    %22 = vector.shape_cast %21 : vector<1x16x5xf32> to vector<16x5xf32>
    %23 = vector.shape_cast %20 : vector<16x5xf32> to vector<1x16x5xf32>
    tpu.vector_store %arg3[%c0_15, %c0_16, %c0_17], %23 {strides = array<i32>} : memref<3x16x48xf32, #tpu.memory_space<vmem>>, vector<1x16x5xf32>,
    %cst_18 = arith.constant 1.000000e-01 : f32
    %24 = vector.broadcast %cst_18 : f32 to vector<16x27xf32>
    %c0_19 = arith.constant 0 : index
    %c0_20 = arith.constant 0 : index
    %c21 = arith.constant 21 : index
    %25 = vector.load %arg3[%c0_19, %c0_20, %c21] : memref<3x16x48xf32, #tpu.memory_space<vmem>>, vector<1x16x27xf32>
    %26 = vector.shape_cast %25 : vector<1x16x27xf32> to vector<16x27xf32>
    %27 = vector.shape_cast %24 : vector<16x27xf32> to vector<1x16x27xf32>
    tpu.vector_store %arg3[%c0_19, %c0_20, %c21], %27 {strides = array<i32>} : memref<3x16x48xf32, #tpu.memory_space<vmem>>, vector<1x16x27xf32>,
    %c1 = arith.constant 1 : index
    %c0_21 = arith.constant 0 : index
    %c0_22 = arith.constant 0 : index
    %28 = vector.load %arg4[%c1, %c0_21, %c0_22] : memref<3x16x16xf32, #tpu.memory_space<vmem>>, vector<1x16x16xf32>
    %29 = vector.shape_cast %28 : vector<1x16x16xf32> to vector<16x16xf32>
    %cst_23 = arith.constant 2.000000e-01 : f32
    %30 = vector.broadcast %cst_23 : f32 to vector<16x16xf32>
    %31 = arith.select %8, %29, %30 : vector<16x16xi1>, vector<16x16xf32>
    %c1_24 = arith.constant 1 : index
    %c0_25 = arith.constant 0 : index
    %c5_26 = arith.constant 5 : index
    %32 = vector.load %arg3[%c1_24, %c0_25, %c5_26] : memref<3x16x48xf32, #tpu.memory_space<vmem>>, vector<1x16x16xf32>
    %33 = vector.shape_cast %32 : vector<1x16x16xf32> to vector<16x16xf32>
    %34 = vector.shape_cast %31 : vector<16x16xf32> to vector<1x16x16xf32>
    tpu.vector_store %arg3[%c1_24, %c0_25, %c5_26], %34 {strides = array<i32>} : memref<3x16x48xf32, #tpu.memory_space<vmem>>, vector<1x16x16xf32>,
    %cst_27 = arith.constant 2.000000e-01 : f32
    %35 = vector.broadcast %cst_27 : f32 to vector<16x5xf32>
    %c1_28 = arith.constant 1 : index
    %c0_29 = arith.constant 0 : index
    %c0_30 = arith.constant 0 : index
    %36 = vector.load %arg3[%c1_28, %c0_29, %c0_30] : memref<3x16x48xf32, #tpu.memory_space<vmem>>, vector<1x16x5xf32>
    %37 = vector.shape_cast %36 : vector<1x16x5xf32> to vector<16x5xf32>
    %38 = vector.shape_cast %35 : vector<16x5xf32> to vector<1x16x5xf32>
    tpu.vector_store %arg3[%c1_28, %c0_29, %c0_30], %38 {strides = array<i32>} : memref<3x16x48xf32, #tpu.memory_space<vmem>>, vector<1x16x5xf32>,
    %cst_31 = arith.constant 2.000000e-01 : f32
    %39 = vector.broadcast %cst_31 : f32 to vector<16x27xf32>
    %c1_32 = arith.constant 1 : index
    %c0_33 = arith.constant 0 : index
    %c21_34 = arith.constant 21 : index
    %40 = vector.load %arg3[%c1_32, %c0_33, %c21_34] : memref<3x16x48xf32, #tpu.memory_space<vmem>>, vector<1x16x27xf32>
    %41 = vector.shape_cast %40 : vector<1x16x27xf32> to vector<16x27xf32>
    %42 = vector.shape_cast %39 : vector<16x27xf32> to vector<1x16x27xf32>
    tpu.vector_store %arg3[%c1_32, %c0_33, %c21_34], %42 {strides = array<i32>} : memref<3x16x48xf32, #tpu.memory_space<vmem>>, vector<1x16x27xf32>,
    %c2 = arith.constant 2 : index
    %c0_35 = arith.constant 0 : index
    %c0_36 = arith.constant 0 : index
    %43 = vector.load %arg4[%c2, %c0_35, %c0_36] : memref<3x16x16xf32, #tpu.memory_space<vmem>>, vector<1x16x16xf32>
    %44 = vector.shape_cast %43 : vector<1x16x16xf32> to vector<16x16xf32>
    %cst_37 = arith.constant 3.000000e-01 : f32
    %45 = vector.broadcast %cst_37 : f32 to vector<16x16xf32>
    %46 = arith.select %8, %44, %45 : vector<16x16xi1>, vector<16x16xf32>
    %c2_38 = arith.constant 2 : index
    %c0_39 = arith.constant 0 : index
    %c5_40 = arith.constant 5 : index
    %47 = vector.load %arg3[%c2_38, %c0_39, %c5_40] : memref<3x16x48xf32, #tpu.memory_space<vmem>>, vector<1x16x16xf32>
    %48 = vector.shape_cast %47 : vector<1x16x16xf32> to vector<16x16xf32>
    %49 = vector.shape_cast %46 : vector<16x16xf32> to vector<1x16x16xf32>
    tpu.vector_store %arg3[%c2_38, %c0_39, %c5_40], %49 {strides = array<i32>} : memref<3x16x48xf32, #tpu.memory_space<vmem>>, vector<1x16x16xf32>,
    %cst_41 = arith.constant 3.000000e-01 : f32
    %50 = vector.broadcast %cst_41 : f32 to vector<16x5xf32>
    %c2_42 = arith.constant 2 : index
    %c0_43 = arith.constant 0 : index
    %c0_44 = arith.constant 0 : index
    %51 = vector.load %arg3[%c2_42, %c0_43, %c0_44] : memref<3x16x48xf32, #tpu.memory_space<vmem>>, vector<1x16x5xf32>
    %52 = vector.shape_cast %51 : vector<1x16x5xf32> to vector<16x5xf32>
    %53 = vector.shape_cast %50 : vector<16x5xf32> to vector<1x16x5xf32>
    tpu.vector_store %arg3[%c2_42, %c0_43, %c0_44], %53 {strides = array<i32>} : memref<3x16x48xf32, #tpu.memory_space<vmem>>, vector<1x16x5xf32>,
    %cst_45 = arith.constant 3.000000e-01 : f32
    %54 = vector.broadcast %cst_45 : f32 to vector<16x27xf32>
    %c2_46 = arith.constant 2 : index
    %c0_47 = arith.constant 0 : index
    %c21_48 = arith.constant 21 : index
    %55 = vector.load %arg3[%c2_46, %c0_47, %c21_48] : memref<3x16x48xf32, #tpu.memory_space<vmem>>, vector<1x16x27xf32>
    %56 = vector.shape_cast %55 : vector<1x16x27xf32> to vector<16x27xf32>
    %57 = vector.shape_cast %54 : vector<16x27xf32> to vector<1x16x27xf32>
    tpu.vector_store %arg3[%c2_46, %c0_47, %c21_48], %57 {strides = array<i32>} : memref<3x16x48xf32, #tpu.memory_space<vmem>>, vector<1x16x27xf32>,
    return
  }
  func.func @transform_0(%arg0: i32) -> (i32, i32, i32) {
    %c1_i32 = arith.constant 1 : i32
    %0 = arith.subi %arg0, %c1_i32 : i32
    %c0_i32 = arith.constant 0 : i32
    %1 = arith.addi %0, %c0_i32 : i32
    %c0_i32_0 = arith.constant 0 : i32
    %c0_i32_1 = arith.constant 0 : i32
    %2 = arith.maxsi %c0_i32_0, %1 : i32
    %3 = arith.minsi %c0_i32_1, %2 : i32
    %c0_i32_2 = arith.constant 0 : i32
    %c0_i32_3 = arith.constant 0 : i32
    %c0_i32_4 = arith.constant 0 : i32
    return %c0_i32_2, %3, %c0_i32_3 : i32, i32, i32
  }
  func.func @transform_1(%arg0: i32) -> (i32, i32, i32) {
    %c1_i32 = arith.constant 1 : i32
    %0 = arith.subi %arg0, %c1_i32 : i32
    %c1_i32_0 = arith.constant 1 : i32
    %1 = arith.addi %0, %c1_i32_0 : i32
    %c0_i32 = arith.constant 0 : i32
    %c0_i32_1 = arith.constant 0 : i32
    %2 = arith.maxsi %c0_i32, %1 : i32
    %3 = arith.minsi %c0_i32_1, %2 : i32
    %c0_i32_2 = arith.constant 0 : i32
    %c0_i32_3 = arith.constant 0 : i32
    %c0_i32_4 = arith.constant 0 : i32
    return %c0_i32_2, %3, %c0_i32_3 : i32, i32, i32
  }
  func.func @transform_2(%arg0: i32) -> (i32, i32, i32) {
    %c0_i32 = arith.constant 0 : i32
    %c0_i32_0 = arith.constant 0 : i32
    %c0_i32_1 = arith.constant 0 : i32
    return %c0_i32, %arg0, %c0_i32_0 : i32, i32, i32
  }
}

</mosaic_0001>

<llo_original>
// kernel: tpu_custom_call.1
$region0: #{tpu_custom_call.1}
  #allocation0 [shape = 'u32[]', space=smem, size = 0x4, offset = 0x4, fixed_abs, tag = 'smem constant byte address 0x4 - core index']
  #allocation1 [shape = 'u32[144,128]{1,0:T(1,128)}', space=vmem, size = 0x12000, scoped, tag = 'internal scratch']
  #allocation2 [shape = 'f32[3,16,16]{2,1,0:T(8,128)}', space=vmem, size = 0x6000, scoped, tag = 'scratch operand']
  #allocation9 [shape = 's32[]', space=sflag, size = 0x4, offset = 0, fixed_abs, tag = 'sflag constant byte address 0x0 - dummy sync flag']
  %s0 = inlined_call_operand.hbm [shape: f32[3,16,16], index: 0, kind: input, shape index: {}]
  %s1 = inlined_call_operand.hbm [shape: f32[3,16,16], index: 1, kind: input, shape index: {}]
  %s2 = inlined_call_operand.hbm [shape: f32[3,40,48], index: 2, kind: output, shape index: {}]
  %s3 = sld [smem:[#allocation0]]
  $region49: #{tpu_custom_call.1} parent=0
    _
  %s5 = ssub.s32 1, %s3
  %s6 = scalar_select 0, %s5, %s3
  $region1: #{tpu_custom_call.1} parent=0
    #allocation3 [shape = 'u8[49152]{0}', space=vmem, size = 0xc000, scoped, tag = 'input window, operand 0']
    #allocation4 [shape = 's32[2]{0}', space=sflag, size = 0x8, scoped, tag = 'scoped memory for tpu_custom_call.1']
    #allocation5 [shape = 's32[2]{0}', space=sflag, size = 0x8, scoped, tag = 'scoped memory for tpu_custom_call.1']
    #allocation6 [shape = 'u8[49152]{0}', space=vmem, size = 0xc000, scoped, tag = 'input window, operand 1']
    #allocation7 [shape = 's32[2]{0}', space=sflag, size = 0x8, scoped, tag = 'scoped memory for tpu_custom_call.1']
    #allocation8 [shape = 'u8[49152]{0}', space=vmem, size = 0xc000, scoped, tag = 'output window, operand 0']
    %7 = vsyncpa [#allocation4], 0
    %s8 = scalar_lea.sflag [#allocation4], 1
    %9 = vsyncpa %s8, 0
    %10 = vsyncpa [#allocation7], 0
    %s11 = scalar_lea.sflag [#allocation7], 1
    %12 = vsyncpa %s11, 0
    %13 = vsyncpa [#allocation5], 0
    %s14 = scalar_lea.sflag [#allocation5], 1
    %15 = vsyncpa %s14, 0
    loop: start=0, step=1, limit=5
    $region2: #{tpu_custom_call.1} parent=1 // loop_pre_header
      _
    $region3: #{tpu_custom_call.1} parent=1 // loop_header
      %s17 = sphi 0, %s21
      %p18 = scmp.ge.s32.totalorder %s17, 5
      %s37 = sphi 0, %s39
      %s40 = sphi 0, %s37
      %s41 = sphi 0, %s40
      %s57 = sphi 0, %s41
      %s71 = sphi 0, %s73
      %s74 = sphi 0, %s71
      %s75 = sphi 0, %s74
      %s91 = sphi 0, %s75
      %s97 = sphi 0, %s99
      %s100 = sphi 0, %s97
      %s101 = sphi 0, %s100
      %s117 = sphi 0, %s101
    $region4: #{tpu_custom_call.1} parent=1 // loop_header_branch
      %20 = sbr.rel (%p18) target = $region8
    $region5: #{tpu_custom_call.1} parent=1 // loop_body
      %s22 = ssub.s32 %s17, 1
      %s23 = ssub.s32 %s17, 2
      %s24 = sadd.s32 %s17, 1
      %s25 = ssub.s32 %s17, 1
      %p26 = scmp.gt.s32.totalorder %s25, 0
      %s27 = scalar_select %p26, %s25, 0
      %p28 = scmp.lt.s32.totalorder %s27, 0
      %s29 = scalar_select %p28, %s27, 0
      %s30 = ssub.s32 %s24, 1
      %p31 = scmp.gt.s32.totalorder %s30, 0
      %s32 = scalar_select %p31, %s30, 0
      %p33 = scmp.lt.s32.totalorder %s32, 0
      %s34 = scalar_select %p33, %s32, 0
      %s35 = ssub.s32 %s29, %s34
      %p36 = scmp.eq.s32.totalorder %s35, 0
      %s38 = sadd.s32 %s37, 1
      %s39 = scalar_select %p36, %s37, %s38
      %p42 = pneg %p36
      %p43 = scmp.eq.s32.totalorder %s17, 2
      %p44 = por %p42, %p43
      %p45 = scmp.ne.s32.totalorder %s37, %s40
      %p46 = scmp.eq.s32.totalorder %s17, 0
      %p47 = por %p45, %p46
      %p48 = scmp.ne.s32.totalorder %s37, %s40
      %p49 = scmp.eq.s32.totalorder %s22, 2
      %p50 = por %p48, %p49
      %p51 = scmp.ne.s32.totalorder %s40, %s41
      %p52 = scmp.eq.s32.totalorder %s22, 0
      %p53 = por %p51, %p52
      %p54 = scmp.ne.s32.totalorder %s40, %s41
      %p55 = scmp.eq.s32.totalorder %s23, 2
      %p56 = por %p54, %p55
      %p58 = scmp.ne.s32.totalorder %s41, %s57
      %p59 = scmp.eq.s32.totalorder %s23, 0
      %p60 = por %p58, %p59
      %p61 = scmp.gt.s32.totalorder %s17, 0
      %s62 = scalar_select %p61, %s17, 0
      %p63 = scmp.lt.s32.totalorder %s62, 0
      %s64 = scalar_select %p63, %s62, 0
      %p65 = scmp.gt.s32.totalorder %s24, 0
      %s66 = scalar_select %p65, %s24, 0
      %p67 = scmp.lt.s32.totalorder %s66, 0
      %s68 = scalar_select %p67, %s66, 0
      %s69 = ssub.s32 %s64, %s68
      %p70 = scmp.eq.s32.totalorder %s69, 0
      %s72 = sadd.s32 %s71, 1
      %s73 = scalar_select %p70, %s71, %s72
      %p76 = pneg %p70
      %p77 = scmp.eq.s32.totalorder %s17, 2
      %p78 = por %p76, %p77
      %p79 = scmp.ne.s32.totalorder %s71, %s74
      %p80 = scmp.eq.s32.totalorder %s17, 0
      %p81 = por %p79, %p80
      %p82 = scmp.ne.s32.totalorder %s71, %s74
      %p83 = scmp.eq.s32.totalorder %s22, 2
      %p84 = por %p82, %p83
      %p85 = scmp.ne.s32.totalorder %s74, %s75
      %p86 = scmp.eq.s32.totalorder %s22, 0
      %p87 = por %p85, %p86
      %p88 = scmp.ne.s32.totalorder %s74, %s75
      %p89 = scmp.eq.s32.totalorder %s23, 2
      %p90 = por %p88, %p89
      %p92 = scmp.ne.s32.totalorder %s75, %s91
      %p93 = scmp.eq.s32.totalorder %s23, 0
      %p94 = por %p92, %p93
      %s95 = ssub.s32 %s17, %s24
      %p96 = scmp.eq.s32.totalorder %s95, 0
      %s98 = sadd.s32 %s97, 1
      %s99 = scalar_select %p96, %s97, %s98
      %p102 = pneg %p96
      %p103 = scmp.eq.s32.totalorder %s17, 2
      %p104 = por %p102, %p103
      %p105 = scmp.ne.s32.totalorder %s97, %s100
      %p106 = scmp.eq.s32.totalorder %s17, 0
      %p107 = por %p105, %p106
      %p108 = scmp.ne.s32.totalorder %s97, %s100
      %p109 = scmp.eq.s32.totalorder %s22, 2
      %p110 = por %p108, %p109
      %p111 = scmp.ne.s32.totalorder %s100, %s101
      %p112 = scmp.eq.s32.totalorder %s22, 0
      %p113 = por %p111, %p112
      %p114 = scmp.ne.s32.totalorder %s100, %s101
      %p115 = scmp.eq.s32.totalorder %s23, 2
      %p116 = por %p114, %p115
      %p118 = scmp.ne.s32.totalorder %s101, %s117
      %p119 = scmp.eq.s32.totalorder %s23, 0
      %p120 = por %p118, %p119
      %p121 = scmp.le.s32.totalorder 1, %s17
      %p122 = scmp.lt.s32.totalorder %s17, 4
      %p123 = pnand %p121, %p122
      %p124 = pneg %p123
      // Predicated region
      $region9: #{tpu_custom_call.1} parent=5 // pred_check
        _
      $region10: #{tpu_custom_call.1} parent=5 // pred_check_branch
        %126 = sbr.rel (%p123) target = $region12
      $region11: #{tpu_custom_call.1} parent=5 // pred_region
        %s127 = ssub.s32 %s17, 1
      $region12: #{tpu_custom_call.1} parent=5 // pred_fallthru
        _
      %p128 = scmp.lt.s32.totalorder %s17, 3
      // Predicated region
      $region13: #{tpu_custom_call.1} parent=5 // pred_check
        %p129 = pneg %p128
      $region14: #{tpu_custom_call.1} parent=5 // pred_check_branch
        %131 = sbr.rel (%p129) target = $region16
      $region15: #{tpu_custom_call.1} parent=5 // pred_region
        // Predicated region
        $region17: #{tpu_custom_call.1} parent=15 // pred_check
          %p132 = pneg %p47
        $region18: #{tpu_custom_call.1} parent=15 // pred_check_branch
          %134 = sbr.rel (%p132) target = $region20
        $region19: #{tpu_custom_call.1} parent=15 // pred_region
          %s135 = sand.u32 %s37, 1
          %s136 = scalar_lea.sflag [#allocation4], %s135
          %s137 = sand.u32 %s37, 1
          %s138 = smul.addr %s137, 48
          %s139 = scalar_lea.vmem [#allocation3], %s138
          %s140 = ssub.s32 %s17, 1
          %p141 = scmp.gt.s32.totalorder %s140, 0
          %s142 = scalar_select %p141, %s140, 0
          %p143 = scmp.lt.s32.totalorder %s142, 0
          %s144 = scalar_select %p143, %s142, 0
          %s145 = smul.u32 2, %s144
          %s147 = ssub.s32 768, 768
          %148 = vsyncadd %s136, %s147
          %s149 = smul.addr %s145, 128
          %s150 = scalar_lea.hbm %s0, %s149
          %s151 = sshll.u32 %s139, 4
          %s152 = int_to_ptr.vmem [resolvable:$true] %s151
          %157 = dma.hbm_to_vmem [thread:$0]  %s150, 768, %s152, %s136, 128, 128, 8
        $region20: #{tpu_custom_call.1} parent=15 // pred_fallthru
          _
        // Predicated region
        $region21: #{tpu_custom_call.1} parent=15 // pred_check
          %p158 = pneg %p81
        $region22: #{tpu_custom_call.1} parent=15 // pred_check_branch
          %160 = sbr.rel (%p158) target = $region24
        $region23: #{tpu_custom_call.1} parent=15 // pred_region
          %s161 = sand.u32 %s71, 1
          %s162 = scalar_lea.sflag [#allocation7], %s161
          %s163 = sand.u32 %s71, 1
          %s164 = smul.addr %s163, 48
          %s165 = scalar_lea.vmem [#allocation6], %s164
          %p166 = scmp.gt.s32.totalorder %s17, 0
          %s167 = scalar_select %p166, %s17, 0
          %p168 = scmp.lt.s32.totalorder %s167, 0
          %s169 = scalar_select %p168, %s167, 0
          %s170 = smul.u32 2, %s169
          %s172 = ssub.s32 768, 768
          %173 = vsyncadd %s162, %s172
          %s174 = smul.addr %s170, 128
          %s175 = scalar_lea.hbm %s1, %s174
          %s176 = sshll.u32 %s165, 4
          %s177 = int_to_ptr.vmem [resolvable:$true] %s176
          %182 = dma.hbm_to_vmem [thread:$0]  %s175, 768, %s177, %s162, 128, 128, 8
        $region24: #{tpu_custom_call.1} parent=15 // pred_fallthru
          _
      $region16: #{tpu_custom_call.1} parent=5 // pred_fallthru
        _
      %p183 = scmp.le.s32.totalorder 1, %s17
      %p184 = scmp.lt.s32.totalorder %s17, 4
      %p185 = pnand %p183, %p184
      %p186 = pneg %p185
      // Predicated region
      $region25: #{tpu_custom_call.1} parent=5 // pred_check
        _
      $region26: #{tpu_custom_call.1} parent=5 // pred_check_branch
        %188 = sbr.rel (%p185) target = $region28
      $region27: #{tpu_custom_call.1} parent=5 // pred_region
        %s189 = ssub.s32 %s17, 1
        %s190 = sand.u32 %s40, 1
        %s191 = scalar_lea.sflag [#allocation4], %s190
        %s192 = sand.u32 %s40, 1
        %s193 = smul.addr %s192, 48
        %s194 = scalar_lea.vmem [#allocation3], %s193
        // Predicated region
        $region29: #{tpu_custom_call.1} parent=27 // pred_check
          %p195 = pneg %p53
        $region30: #{tpu_custom_call.1} parent=27 // pred_check_branch
          %197 = sbr.rel (%p195) target = $region32
        $region31: #{tpu_custom_call.1} parent=27 // pred_region
          %198 = dma.done %s191, 768
        $region32: #{tpu_custom_call.1} parent=27 // pred_fallthru
          _
        %s199 = sand.u32 %s74, 1
        %s200 = scalar_lea.sflag [#allocation7], %s199
        %s201 = sand.u32 %s74, 1
        %s202 = smul.addr %s201, 48
        %s203 = scalar_lea.vmem [#allocation6], %s202
        // Predicated region
        $region33: #{tpu_custom_call.1} parent=27 // pred_check
          %p204 = pneg %p87
        $region34: #{tpu_custom_call.1} parent=27 // pred_check_branch
          %206 = sbr.rel (%p204) target = $region36
        $region35: #{tpu_custom_call.1} parent=27 // pred_region
          %207 = dma.done %s200, 768
        $region36: #{tpu_custom_call.1} parent=27 // pred_fallthru
          _
        %s208 = sand.u32 %s40, 1
        %s209 = scalar_lea.sflag [#allocation4], %s208
        %s210 = sand.u32 %s40, 1
        %s211 = smul.addr %s210, 48
        %s212 = scalar_lea.vmem [#allocation3], %s211
        %p213 = pneg %p53
        %p214 = pneg %p50
        %s215 = sand.u32 %s74, 1
        %s216 = scalar_lea.sflag [#allocation7], %s215
        %s217 = sand.u32 %s74, 1
        %s218 = smul.addr %s217, 48
        %s219 = scalar_lea.vmem [#allocation6], %s218
        %p220 = pneg %p87
        %p221 = pneg %p84
        %p222 = pneg %p113
        %p223 = pneg %p110
        %s224 = sand.u32 %s100, 1
        %s225 = scalar_lea.sflag [#allocation5], %s224
        %s226 = sand.u32 %s100, 1
        %s227 = smul.addr %s226, 48
        %s228 = scalar_lea.vmem [#allocation8], %s227
        %s229 = ssub.s32 %s22, 1
        %p230 = scmp.gt.s32.totalorder %s229, 0
        %s231 = scalar_select %p230, %s229, 0
        %p232 = scmp.lt.s32.totalorder %s231, 0
        %s233 = scalar_select %p232, %s231, 0
        %s234 = smul.u32 2, %s233
        %p235 = scmp.gt.s32.totalorder %s22, 0
        %s236 = scalar_select %p235, %s22, 0
        %p237 = scmp.lt.s32.totalorder %s236, 0
        %s238 = scalar_select %p237, %s236, 0
        %s239 = smul.u32 2, %s238
        %s240 = smul.u32 2, %s22
        %s241 = ssub.s32 5, %s240
        %p242 = scmp.lt.s32.totalorder %s241, 2
        %s243 = scalar_select %p242, %s241, 2
        %s244 = smul.u32 384, %s243
        %s245 = smul.u32 %s22, 16
        %v246 = vlaneseq
        %v247 = vshrl.u32 %v246, 7
        %v248 = vadd.s32 %v247, 8
        %v249 = vstv %s245
        %v250 = vadd.s32 %v249, %v247
        %v251 = vadd.s32 %v249, %v248
        %vm252 = vcmp.ge.s32.totalorder %v250, 7
        %vm253 = vcmp.ge.s32.totalorder %v251, 7
        %vm254 = vcmp.lt.s32.totalorder %v250, 23
        %vm255 = vcmp.lt.s32.totalorder %v251, 23
        %vm256 = vmand %vm252, %vm254
        %vm257 = vmand %vm253, %vm255
        %v258 = vld [vmem:[%s194 + $0x9] sm:$0x7f]
        %v259 = vld [vmem:[%s194 + $0x19] sm:$0x7f]
        %v260 = vld [vmem:[%s194 + $0x29] sm:$0x7f]
        %vm261 = vcmask 129024
        %262 = vst.msk [vmem:[#allocation2] sm:$0x7f] %vm261, %v258
        %263 = vst.msk [vmem:[#allocation2 + $0x10] sm:$0x7f] %vm261, %v259
        %264 = vst.msk [vmem:[#allocation2 + $0x20] sm:$0x7f] %vm261, %v260
        %v265 = vld [vmem:[%s203] sm:$0xff]
        %v266 = vld [vmem:[%s203 + $0x8] sm:$0x1]
        %v267 = vld [vmem:[%s203 + $0x10] sm:$0xff]
        %v268 = vld [vmem:[%s203 + $0x18] sm:$0x1]
        %v269 = vld [vmem:[%s203 + $0x20] sm:$0xff]
        %v270 = vld [vmem:[%s203 + $0x28] sm:$0x1]
        %vm271 = vcmask 130048
        %272 = vst.msk [vmem:[#allocation2 + $0x7] sm:$0xff] %vm271, %v265
        %vm273 = vcmask 122880
        %274 = vst.msk [vmem:[#allocation2 + $0xf] sm:$0x1] %vm273, %v266
        %275 = vst.msk [vmem:[#allocation2 + $0x17] sm:$0xff] %vm271, %v267
        %276 = vst.msk [vmem:[#allocation2 + $0x1f] sm:$0x1] %vm273, %v268
        %277 = vst.msk [vmem:[#allocation2 + $0x27] sm:$0xff] %vm271, %v269
        %278 = vst.msk [vmem:[#allocation2 + $0x2f] sm:$0x1] %vm273, %v270
        %v279 = vld [vmem:[#allocation2] sm:$0xff]
        %v280 = vld [vmem:[#allocation2 + $0x8] sm:$0xff]
        %v281 = vsel %vm256, %v279, 0.1
        %v282 = vsel %vm257, %v280, 0.1
        %285 = vrot.lane.b32.xlu0 %v281, 5
        %v286 = vpop.permute.xlu0 %285
        %287 = vrot.lane.b32.xlu0 %v282, 5
        %v288 = vpop.permute.xlu0 %287
        %vm291 = vcmask 171048
        %292 = vst.msk [vmem:[%s228] sm:$0xff] %vm291, %v286
        %293 = vst.msk [vmem:[%s228 + $0x8] sm:$0xff] %vm291, %v288
        %vm294 = vcmask 39936
        %295 = vst.msk [vmem:[%s228] sm:$0xff] %vm294, 0.1
        %296 = vst.msk [vmem:[%s228 + $0x8] sm:$0xff] %vm294, 0.1
        %vm297 = vcmask 392360
        %298 = vst.msk [vmem:[%s228] sm:$0xff] %vm297, 0.1
        %299 = vst.msk [vmem:[%s228 + $0x8] sm:$0xff] %vm297, 0.1
        %s300 = scalar_lea.vmem [#allocation2], 16
        %v301 = vld [vmem:[%s300] sm:$0xff]
        %v302 = vld [vmem:[%s300 + $0x8] sm:$0xff]
        %v303 = vsel %vm256, %v301, 0.2
        %v304 = vsel %vm257, %v302, 0.2
        %307 = vrot.lane.b32.xlu0 %v303, 5
        %v308 = vpop.permute.xlu0 %307
        %309 = vrot.lane.b32.xlu0 %v304, 5
        %v310 = vpop.permute.xlu0 %309
        %s313 = scalar_lea.vmem %s228, 16 [#allocation8]
        %314 = vst.msk [vmem:[%s313] sm:$0xff] %vm291, %v308
        %315 = vst.msk [vmem:[%s313 + $0x8] sm:$0xff] %vm291, %v310
        %316 = vst.msk [vmem:[%s313] sm:$0xff] %vm294, 0.2
        %317 = vst.msk [vmem:[%s313 + $0x8] sm:$0xff] %vm294, 0.2
        %318 = vst.msk [vmem:[%s313] sm:$0xff] %vm297, 0.2
        %319 = vst.msk [vmem:[%s313 + $0x8] sm:$0xff] %vm297, 0.2
        %s320 = scalar_lea.vmem [#allocation2], 32
        %v321 = vld [vmem:[%s320] sm:$0xff]
        %v322 = vld [vmem:[%s320 + $0x8] sm:$0xff]
        %v323 = vsel %vm256, %v321, 0.3
        %v324 = vsel %vm257, %v322, 0.3
        %327 = vrot.lane.b32.xlu0 %v323, 5
        %v328 = vpop.permute.xlu0 %327
        %329 = vrot.lane.b32.xlu0 %v324, 5
        %v330 = vpop.permute.xlu0 %329
        %s333 = scalar_lea.vmem %s228, 32 [#allocation8]
        %334 = vst.msk [vmem:[%s333] sm:$0xff] %vm291, %v328
        %335 = vst.msk [vmem:[%s333 + $0x8] sm:$0xff] %vm291, %v330
        %336 = vst.msk [vmem:[%s333] sm:$0xff] %vm294, 0.3
        %337 = vst.msk [vmem:[%s333 + $0x8] sm:$0xff] %vm294, 0.3
        %338 = vst.msk [vmem:[%s333] sm:$0xff] %vm297, 0.3
        %339 = vst.msk [vmem:[%s333 + $0x8] sm:$0xff] %vm297, 0.3
        %s340 = sand.u32 %s100, 1
        %s341 = scalar_lea.sflag [#allocation5], %s340
        %s342 = sand.u32 %s100, 1
        %s343 = smul.addr %s342, 48
        %s344 = scalar_lea.vmem [#allocation8], %s343
        // Predicated region
        $region37: #{tpu_custom_call.1} parent=27 // pred_check
          %p345 = pneg %p110
        $region38: #{tpu_custom_call.1} parent=27 // pred_check_branch
          %347 = sbr.rel (%p345) target = $region40
        $region39: #{tpu_custom_call.1} parent=27 // pred_region
          #allocation10 [shape = 'u32[6]{0}', space=smem, size = 0x18, scoped, tag = 'DMA stride descriptor']
          %s348 = smul.u32 2, %s22
          %s349 = ssub.s32 5, %s348
          %p350 = scmp.lt.s32.totalorder %s349, 2
          %s351 = scalar_select %p350, %s349, 2
          %s352 = smul.u32 384, %s351
          %s354 = ssub.s32 768, %s352
          %355 = vsyncadd %s341, %s354
          %p356 = scmp.ne.s32.totalorder 0, %s352
          %s357 = smul.addr %s348, 128
          %s358 = scalar_lea.hbm %s2, %s357
          %s359 = smul.u32 8, %s351
          %s360 = smul.u32 %s359, 3
          %s362 = sshll.u32 1, 14
          %s363 = sxor.u32 4294967295, %s362
          %s366 = sshll.u32 7, 18
          %s367 = sxor.u32 4294967295, %s366
          %s368 = sand.u32 0, %s367
          %s370 = sor.u32 %s368, 0
          %s371 = sshll.u32 %s344, 4
          %s372 = int_to_ptr.vmem [resolvable:$true] %s371
          %s373 = sshll.u32 %s360, 4
          %378 = sst [smem:[#allocation10]] 256
          %s379 = scalar_lea.smem [#allocation10], 1
          %380 = sst [smem:[%s379]] 640
          %s381 = scalar_lea.smem [#allocation10], 2
          %382 = sst [smem:[%s381]] %s351
          %s383 = scalar_lea.smem [#allocation10], 3
          %384 = sst [smem:[%s383]] 128
          %s385 = scalar_lea.smem [#allocation10], 4
          %386 = sst [smem:[%s385]] 128
          %s387 = scalar_lea.smem [#allocation10], 5
          %388 = sst [smem:[%s387]] 8
          %390 = dma.general (%p356), %s372, %s373, %s358, %s341, 131072, [#allocation10], %s370, 0
        $region40: #{tpu_custom_call.1} parent=27 // pred_fallthru
          _
      $region28: #{tpu_custom_call.1} parent=5 // pred_fallthru
        _
      %p391 = scmp.le.s32.totalorder 2, %s17
      // Predicated region
      $region41: #{tpu_custom_call.1} parent=5 // pred_check
        %p392 = pneg %p391
      $region42: #{tpu_custom_call.1} parent=5 // pred_check_branch
        %394 = sbr.rel (%p392) target = $region44
      $region43: #{tpu_custom_call.1} parent=5 // pred_region
        %s395 = ssub.s32 %s17, 2
        // Predicated region
        $region45: #{tpu_custom_call.1} parent=43 // pred_check
          %p396 = pneg %p116
        $region46: #{tpu_custom_call.1} parent=43 // pred_check_branch
          %398 = sbr.rel (%p396) target = $region48
        $region47: #{tpu_custom_call.1} parent=43 // pred_region
          %s399 = sand.u32 %s101, 1
          %s400 = scalar_lea.sflag [#allocation5], %s399
          %s401 = sand.u32 %s101, 1
          %s402 = smul.addr %s401, 48
          %s403 = scalar_lea.vmem [#allocation8], %s402
          %404 = dma.done %s400, 768
        $region48: #{tpu_custom_call.1} parent=43 // pred_fallthru
          _
      $region44: #{tpu_custom_call.1} parent=5 // pred_fallthru
        _
    $region6: #{tpu_custom_call.1} parent=1 // loop_footer
      %s21 = sadd.s32 1, %s17
    $region7: #{tpu_custom_call.1} parent=1 // loop_footer_branch
      %16 = sbr.rel target = $region3
    $region8: #{tpu_custom_call.1} parent=1 // loop_exit
      _
    %405 = vsyncpa [#allocation4], 1
    %s406 = scalar_lea.sflag [#allocation4], 1
    %407 = vsyncpa %s406, 1
    %408 = vsyncpa [#allocation7], 1
    %s409 = scalar_lea.sflag [#allocation7], 1
    %410 = vsyncpa %s409, 1
    %411 = vsyncpa [#allocation5], 1
    %s412 = scalar_lea.sflag [#allocation5], 1
    %413 = vsyncpa %s412, 1

</llo_original>
